<compile_context>
chip_gen: v5e
topology: v5e:2x2
jax: 0.10.0
libtpu: 0.0.40
codegen_flags: <defaults>
</compile_context>

<pallas_src>
import jax
import jax.numpy as jnp
from jax.experimental import pallas as pl
from jax.experimental.pallas import tpu as pltpu


# ----------------------------------------------------------------------------
# Fused kernel: AtomEncoder + 2x GraphConv + ReLU + masked mean-pool + head.
# One grid step == one graph.
# ----------------------------------------------------------------------------
def regressor_kernel(n_ref,                       # SMEM [B] int32 (scalar prefetch)
                     a_ref, hf_ref, emb_ref,      # per-graph adj, feats; emb table
                     w1_ref, b1_ref, w2_ref, b2_ref,
                     wr_ref, br_ref,
                     out_ref):
    b = pl.program_id(0)
    n_valid = n_ref[b]                            # true node count of this graph

    a = a_ref[0]                                  # [N, N]   bf16 normalized adj
    feats = hf_ref[0]                             # [N, F]   int32 categorical feats
    N, F = feats.shape
    FV, _ = emb_ref.shape                         # [F*vocab, in_dim] bf16
    vocab = FV // F

    # ---- fused AtomEncoder: multi-hot [N, F*vocab] @ emb_flat (MXU) --------
    lane_iota = jax.lax.broadcasted_iota(jnp.int32, (N, FV), 1)
    multi_hot = jnp.zeros((N, FV), jnp.float32)
    for f in range(F):                            # static unroll (F is small)
        idx_f = feats[:, f:f + 1] + f * vocab     # [N, 1] flattened table index
        multi_hot = multi_hot + (lane_iota == idx_f).astype(jnp.float32)
    h0 = jnp.dot(multi_hot.astype(jnp.bfloat16), emb_ref[...],
                 preferred_element_type=jnp.float32)        # [N, in_dim] f32

    # ---- GraphConv: A_norm @ h @ W + b, DGL ordering rule ------------------
    def graph_conv(h_f32, w_ref, b_ref):
        h_bf = h_f32.astype(jnp.bfloat16)
        w = w_ref[...]                            # bf16
        in_d, out_d = w.shape
        if in_d > out_d:                          # static (trace-time) choice
            hw = jnp.dot(h_bf, w, preferred_element_type=jnp.float32)
            z = jnp.dot(a, hw.astype(jnp.bfloat16),
                        preferred_element_type=jnp.float32)
        else:
            ah = jnp.dot(a, h_bf, preferred_element_type=jnp.float32)
            z = jnp.dot(ah.astype(jnp.bfloat16), w,
                        preferred_element_type=jnp.float32)
        return jnp.maximum(z + b_ref[...], 0.0)   # bias + ReLU in f32

    h1 = graph_conv(h0, w1_ref, b1_ref)           # [N, hidden]
    h2 = graph_conv(h1, w2_ref, b2_ref)           # [N, hidden]

    # ---- dgl.mean_nodes: masked mean over the true (un-padded) nodes -------
    row_id = jax.lax.broadcasted_iota(jnp.int32, h2.shape, 0)
    mask = (row_id < n_valid).astype(jnp.float32)
    hg = jnp.sum(h2 * mask, axis=0, keepdims=True) / n_valid.astype(jnp.float32)

    # ---- regression head on VPU/XLU (no degenerate 1x32x1 MXU matmul) ------
    y = jnp.sum(hg * wr_ref[...], axis=1, keepdims=True) + br_ref[...]   # [1,1]
    out_ref[...] = y.reshape(1, 1, 1)


# ----------------------------------------------------------------------------
# Wrapper
# ----------------------------------------------------------------------------
def regressor_forward(n_valid, a_norm, h_feats, params):
    """Batched forward pass.

    n_valid : [B]        int32   true node count per graph
    a_norm  : [B, N, N]  float32 normalized adjacency (padded with zeros)
    h_feats : [B, N, F]  int32   categorical atom features (padded arbitrarily)
    """
    B, N, _ = a_norm.shape
    F = h_feats.shape[2]

    emb = params["atom_emb"]                      # [F, vocab, in_dim]
    in_dim = emb.shape[2]
    hidden = params["w1"].shape[1]
    FV = F * emb.shape[1]

    # One-time casts / reshapes (host-side, outside the hot path).
    emb_flat = emb.reshape(FV, in_dim).astype(jnp.bfloat16)
    a_bf = a_norm.astype(jnp.bfloat16)
    w1 = params["w1"].astype(jnp.bfloat16)
    w2 = params["w2"].astype(jnp.bfloat16)
    wr_row = params["wr"].reshape(1, hidden)      # Linear weight as [1, hidden]

    flops = 2 * B * (N * FV * in_dim            # fused atom encoder matmul
                     + N * N * in_dim + N * in_dim * hidden   # conv1
                     + N * N * hidden + N * hidden * hidden)  # conv2
    bytes_accessed = (a_bf.size * 2 + h_feats.size * 4 + emb_flat.size * 2
                      + w1.size * 2 + w2.size * 2
                      + params["b1"].size * 4 + params["b2"].size * 4
                      + wr_row.size * 4 + params["br"].size * 4
                      + B * 4 + B * 4)

    grid_spec = pltpu.PrefetchScalarGridSpec(
        num_scalar_prefetch=1,                    # n_valid -> SMEM
        grid=(B,),
        in_specs=[
            pl.BlockSpec((1, N, N), lambda b, n: (b, 0, 0)),       # a_norm
            pl.BlockSpec((1, N, F), lambda b, n: (b, 0, 0)),       # h_feats
            pl.BlockSpec((FV, in_dim), lambda b, n: (0, 0)),       # emb table
            pl.BlockSpec((in_dim, hidden), lambda b, n: (0, 0)),   # W1
            pl.BlockSpec((1, hidden), lambda b, n: (0, 0)),        # b1
            pl.BlockSpec((hidden, hidden), lambda b, n: (0, 0)),   # W2
            pl.BlockSpec((1, hidden), lambda b, n: (0, 0)),        # b2
            pl.BlockSpec((1, hidden), lambda b, n: (0, 0)),        # wr (row)
            pl.BlockSpec((1, 1), lambda b, n: (0, 0)),             # br
        ],
        out_specs=pl.BlockSpec((1, 1, 1), lambda b, n: (b, 0, 0)),
    )

    out = pl.pallas_call(
        regressor_kernel,
        out_shape=jax.ShapeDtypeStruct((B, 1, 1), jnp.float32),
        grid_spec=grid_spec,
        compiler_params=pltpu.CompilerParams(
            dimension_semantics=("parallel",)),
        cost_estimate=pl.CostEstimate(flops=flops, transcendentals=0,
                                      bytes_accessed=bytes_accessed),
    )(n_valid, a_bf, h_feats, emb_flat,
      w1, params["b1"], w2, params["b2"],
      wr_row, params["br"])

    return out.reshape(B, 1)                      # per-graph prediction


# ----------------------------------------------------------------------------
# Deterministic parameter / input construction
# ----------------------------------------------------------------------------
def make_params(key, in_dim, hidden_dim, num_atom_feats, vocab):
    ks = jax.random.split(key, 8)
    scale = 0.1
    return {
        "atom_emb": scale * jax.random.normal(
            ks[0], (num_atom_feats, vocab, in_dim), jnp.float32),
        "w1": scale * jax.random.normal(ks[1], (in_dim, hidden_dim), jnp.float32),
        "b1": scale * jax.random.normal(ks[2], (1, hidden_dim), jnp.float32),
        "w2": scale * jax.random.normal(ks[3], (hidden_dim, hidden_dim), jnp.float32),
        "b2": scale * jax.random.normal(ks[4], (1, hidden_dim), jnp.float32),
        "wr": scale * jax.random.normal(ks[5], (hidden_dim, 1), jnp.float32),
        "br": scale * jax.random.normal(ks[6], (1, 1), jnp.float32),
    }


def make_ring_graph(n_valid, n_max):
    """Symmetric ring over the first n_valid nodes, zero-padded to n_max.

    Degree-0 (padding) nodes get a clamped norm of 0, matching DGL behavior.
    """
    idx = jnp.arange(n_valid)
    a = jnp.zeros((n_max, n_max), jnp.float32)
    a = a.at[idx, (idx + 1) % n_valid].set(1.0)
    a = a.at[(idx + 1) % n_valid, idx].set(1.0)
    deg = jnp.sum(a, axis=1)
    d_inv_sqrt = jnp.where(deg > 0.0, 1.0 / jnp.sqrt(jnp.maximum(deg, 1.0)), 0.0)
    return d_inv_sqrt[:, None] * a * d_inv_sqrt[None, :]


if __name__ == "__main__":
    B = 8                 # graphs per batch (one grid step each)
    N_NODES = 16          # padded node count per graph
    IN_DIM = 32           # atom embedding dim
    HIDDEN_DIM = 32       # GraphConv hidden dim
    NUM_ATOM_FEATS = 9    # OGB AtomEncoder has 9 categorical features
    VOCAB = 16            # synthetic vocab per feature

    key = jax.random.PRNGKey(0)
    k_params, k_feats = jax.random.split(key)

    params = make_params(k_params, IN_DIM, HIDDEN_DIM, NUM_ATOM_FEATS, VOCAB)

    # Variable per-graph sizes to exercise the masked mean.
    n_valid_list = [16, 14, 12, 16, 13, 15, 16, 11]
    n_valid = jnp.array(n_valid_list, dtype=jnp.int32)
    a_norm = jnp.stack([make_ring_graph(n, N_NODES) for n in n_valid_list])

    h_feats = jax.random.randint(
        k_feats, (B, N_NODES, NUM_ATOM_FEATS), 0, VOCAB, dtype=jnp.int32)

    out = regressor_forward(n_valid, a_norm, h_feats, params)
    jax.block_until_ready(out)
    assert out.shape == (B, 1)
    assert bool(jnp.all(jnp.isfinite(out)))
    print("KERNEL_OK")
</pallas_src>

<mosaic_0001>
module attributes {stable_mosaic.version = 11 : i64} {
  func.func @regressor_kernel(%arg0: i32, %arg1: memref<8xi32, #tpu.memory_space<smem>>, %arg2: memref<1x16x16xbf16, #tpu.memory_space<vmem>>, %arg3: memref<1x16x9xi32, #tpu.memory_space<vmem>>, %arg4: memref<144x32xbf16, #tpu.memory_space<vmem>>, %arg5: memref<32x32xbf16, #tpu.memory_space<vmem>>, %arg6: memref<1x32xf32, #tpu.memory_space<vmem>>, %arg7: memref<32x32xbf16, #tpu.memory_space<vmem>>, %arg8: memref<1x32xf32, #tpu.memory_space<vmem>>, %arg9: memref<1x32xf32, #tpu.memory_space<vmem>>, %arg10: memref<1x1xf32, #tpu.memory_space<vmem>>, %arg11: memref<1x1x1xf32, #tpu.memory_space<vmem>>) attributes {dimension_semantics = [#tpu.dimension_semantics<parallel>], iteration_bounds = array<i64: 8>, scalar_prefetch = 1 : i64, scratch_operands = 0 : i64, tpu.core_type = #tpu.core_type<tc>, window_params = [{transform_indices = @transform_0, window_bounds = array<i64: 1, 16, 16>}, {transform_indices = @transform_1, window_bounds = array<i64: 1, 16, 9>}, {pipeline_mode = #tpu.pipeline_mode<synchronous>, transform_indices = @transform_2, window_bounds = array<i64: 144, 32>}, {pipeline_mode = #tpu.pipeline_mode<synchronous>, transform_indices = @transform_3, window_bounds = array<i64: 32, 32>}, {pipeline_mode = #tpu.pipeline_mode<synchronous>, transform_indices = @transform_4, window_bounds = array<i64: 1, 32>}, {pipeline_mode = #tpu.pipeline_mode<synchronous>, transform_indices = @transform_5, window_bounds = array<i64: 32, 32>}, {pipeline_mode = #tpu.pipeline_mode<synchronous>, transform_indices = @transform_6, window_bounds = array<i64: 1, 32>}, {pipeline_mode = #tpu.pipeline_mode<synchronous>, transform_indices = @transform_7, window_bounds = array<i64: 1, 32>}, {pipeline_mode = #tpu.pipeline_mode<synchronous>, transform_indices = @transform_8, window_bounds = array<i64: 1, 1>}, {transform_indices = @transform_9, window_bounds = array<i64: 1, 1, 1>}]} {
    %0 = arith.index_cast %arg0 : i32 to index
    %1 = memref.load %arg1[%0] : memref<8xi32, #tpu.memory_space<smem>>
    %c0 = arith.constant 0 : index
    %c0_0 = arith.constant 0 : index
    %c0_1 = arith.constant 0 : index
    %2 = vector.load %arg2[%c0, %c0_0, %c0_1] : memref<1x16x16xbf16, #tpu.memory_space<vmem>>, vector<1x16x16xbf16>
    %3 = vector.shape_cast %2 : vector<1x16x16xbf16> to vector<16x16xbf16>
    %c0_2 = arith.constant 0 : index
    %c0_3 = arith.constant 0 : index
    %c0_4 = arith.constant 0 : index
    %4 = vector.load %arg3[%c0_2, %c0_3, %c0_4] : memref<1x16x9xi32, #tpu.memory_space<vmem>>, vector<1x16x9xi32>
    %5 = vector.shape_cast %4 : vector<1x16x9xi32> to vector<16x9xi32>
    %6 = tpu.iota {dimensions = array<i32: 1>} : vector<16x144xi32>
    %cst = arith.constant 0.000000e+00 : f32
    %7 = vector.broadcast %cst : f32 to vector<16x144xf32>
    %8 = vector.extract_strided_slice %5 {offsets = [0, 0], sizes = [16, 1], strides = [1, 1]} : vector<16x9xi32> to vector<16x1xi32>
    %c0_i32 = arith.constant 0 : i32
    %9 = vector.broadcast %c0_i32 : i32 to vector<16x1xi32>
    %10 = arith.addi %8, %9 : vector<16x1xi32>
    %11 = vector.broadcast %10 : vector<16x1xi32> to vector<16x144xi32>
    %12 = arith.cmpi eq, %6, %11 : vector<16x144xi32>
    %13 = arith.extui %12 : vector<16x144xi1> to vector<16x144xi32>
    %14 = arith.sitofp %13 : vector<16x144xi32> to vector<16x144xf32>
    %15 = arith.addf %7, %14 : vector<16x144xf32>
    %16 = vector.extract_strided_slice %5 {offsets = [0, 1], sizes = [16, 1], strides = [1, 1]} : vector<16x9xi32> to vector<16x1xi32>
    %c16_i32 = arith.constant 16 : i32
    %17 = vector.broadcast %c16_i32 : i32 to vector<16x1xi32>
    %18 = arith.addi %16, %17 : vector<16x1xi32>
    %19 = vector.broadcast %18 : vector<16x1xi32> to vector<16x144xi32>
    %20 = arith.cmpi eq, %6, %19 : vector<16x144xi32>
    %21 = arith.extui %20 : vector<16x144xi1> to vector<16x144xi32>
    %22 = arith.sitofp %21 : vector<16x144xi32> to vector<16x144xf32>
    %23 = arith.addf %15, %22 : vector<16x144xf32>
    %24 = vector.extract_strided_slice %5 {offsets = [0, 2], sizes = [16, 1], strides = [1, 1]} : vector<16x9xi32> to vector<16x1xi32>
    %c32_i32 = arith.constant 32 : i32
    %25 = vector.broadcast %c32_i32 : i32 to vector<16x1xi32>
    %26 = arith.addi %24, %25 : vector<16x1xi32>
    %27 = vector.broadcast %26 : vector<16x1xi32> to vector<16x144xi32>
    %28 = arith.cmpi eq, %6, %27 : vector<16x144xi32>
    %29 = arith.extui %28 : vector<16x144xi1> to vector<16x144xi32>
    %30 = arith.sitofp %29 : vector<16x144xi32> to vector<16x144xf32>
    %31 = arith.addf %23, %30 : vector<16x144xf32>
    %32 = vector.extract_strided_slice %5 {offsets = [0, 3], sizes = [16, 1], strides = [1, 1]} : vector<16x9xi32> to vector<16x1xi32>
    %c48_i32 = arith.constant 48 : i32
    %33 = vector.broadcast %c48_i32 : i32 to vector<16x1xi32>
    %34 = arith.addi %32, %33 : vector<16x1xi32>
    %35 = vector.broadcast %34 : vector<16x1xi32> to vector<16x144xi32>
    %36 = arith.cmpi eq, %6, %35 : vector<16x144xi32>
    %37 = arith.extui %36 : vector<16x144xi1> to vector<16x144xi32>
    %38 = arith.sitofp %37 : vector<16x144xi32> to vector<16x144xf32>
    %39 = arith.addf %31, %38 : vector<16x144xf32>
    %40 = vector.extract_strided_slice %5 {offsets = [0, 4], sizes = [16, 1], strides = [1, 1]} : vector<16x9xi32> to vector<16x1xi32>
    %c64_i32 = arith.constant 64 : i32
    %41 = vector.broadcast %c64_i32 : i32 to vector<16x1xi32>
    %42 = arith.addi %40, %41 : vector<16x1xi32>
    %43 = vector.broadcast %42 : vector<16x1xi32> to vector<16x144xi32>
    %44 = arith.cmpi eq, %6, %43 : vector<16x144xi32>
    %45 = arith.extui %44 : vector<16x144xi1> to vector<16x144xi32>
    %46 = arith.sitofp %45 : vector<16x144xi32> to vector<16x144xf32>
    %47 = arith.addf %39, %46 : vector<16x144xf32>
    %48 = vector.extract_strided_slice %5 {offsets = [0, 5], sizes = [16, 1], strides = [1, 1]} : vector<16x9xi32> to vector<16x1xi32>
    %c80_i32 = arith.constant 80 : i32
    %49 = vector.broadcast %c80_i32 : i32 to vector<16x1xi32>
    %50 = arith.addi %48, %49 : vector<16x1xi32>
    %51 = vector.broadcast %50 : vector<16x1xi32> to vector<16x144xi32>
    %52 = arith.cmpi eq, %6, %51 : vector<16x144xi32>
    %53 = arith.extui %52 : vector<16x144xi1> to vector<16x144xi32>
    %54 = arith.sitofp %53 : vector<16x144xi32> to vector<16x144xf32>
    %55 = arith.addf %47, %54 : vector<16x144xf32>
    %56 = vector.extract_strided_slice %5 {offsets = [0, 6], sizes = [16, 1], strides = [1, 1]} : vector<16x9xi32> to vector<16x1xi32>
    %c96_i32 = arith.constant 96 : i32
    %57 = vector.broadcast %c96_i32 : i32 to vector<16x1xi32>
    %58 = arith.addi %56, %57 : vector<16x1xi32>
    %59 = vector.broadcast %58 : vector<16x1xi32> to vector<16x144xi32>
    %60 = arith.cmpi eq, %6, %59 : vector<16x144xi32>
    %61 = arith.extui %60 : vector<16x144xi1> to vector<16x144xi32>
    %62 = arith.sitofp %61 : vector<16x144xi32> to vector<16x144xf32>
    %63 = arith.addf %55, %62 : vector<16x144xf32>
    %64 = vector.extract_strided_slice %5 {offsets = [0, 7], sizes = [16, 1], strides = [1, 1]} : vector<16x9xi32> to vector<16x1xi32>
    %c112_i32 = arith.constant 112 : i32
    %65 = vector.broadcast %c112_i32 : i32 to vector<16x1xi32>
    %66 = arith.addi %64, %65 : vector<16x1xi32>
    %67 = vector.broadcast %66 : vector<16x1xi32> to vector<16x144xi32>
    %68 = arith.cmpi eq, %6, %67 : vector<16x144xi32>
    %69 = arith.extui %68 : vector<16x144xi1> to vector<16x144xi32>
    %70 = arith.sitofp %69 : vector<16x144xi32> to vector<16x144xf32>
    %71 = arith.addf %63, %70 : vector<16x144xf32>
    %72 = vector.extract_strided_slice %5 {offsets = [0, 8], sizes = [16, 1], strides = [1, 1]} : vector<16x9xi32> to vector<16x1xi32>
    %c128_i32 = arith.constant 128 : i32
    %73 = vector.broadcast %c128_i32 : i32 to vector<16x1xi32>
    %74 = arith.addi %72, %73 : vector<16x1xi32>
    %75 = vector.broadcast %74 : vector<16x1xi32> to vector<16x144xi32>
    %76 = arith.cmpi eq, %6, %75 : vector<16x144xi32>
    %77 = arith.extui %76 : vector<16x144xi1> to vector<16x144xi32>
    %78 = arith.sitofp %77 : vector<16x144xi32> to vector<16x144xf32>
    %79 = arith.addf %71, %78 : vector<16x144xf32>
    %80 = arith.truncf %79 : vector<16x144xf32> to vector<16x144xbf16>
    %c0_5 = arith.constant 0 : index
    %c0_6 = arith.constant 0 : index
    %81 = vector.load %arg4[%c0_5, %c0_6] : memref<144x32xbf16, #tpu.memory_space<vmem>>, vector<144x32xbf16>
    %cst_7 = arith.constant dense<0.000000e+00> : vector<16x32xf32>
    %82 = tpu.matmul %80, %81, %cst_7 {dimension_numbers = #tpu.dot_dimension_numbers<[1], [0], [0], [1], [0, 0, 1, 1], [], []>} : vector<16x144xbf16>, vector<144x32xbf16>, vector<16x32xf32> -> vector<16x32xf32>
    %83 = arith.truncf %82 : vector<16x32xf32> to vector<16x32xbf16>
    %c0_8 = arith.constant 0 : index
    %c0_9 = arith.constant 0 : index
    %84 = vector.load %arg5[%c0_8, %c0_9] : memref<32x32xbf16, #tpu.memory_space<vmem>>, vector<32x32xbf16>
    %cst_10 = arith.constant dense<0.000000e+00> : vector<16x32xf32>
    %85 = tpu.matmul %3, %83, %cst_10 {dimension_numbers = #tpu.dot_dimension_numbers<[1], [0], [0], [1], [0, 0, 1, 1], [], []>} : vector<16x16xbf16>, vector<16x32xbf16>, vector<16x32xf32> -> vector<16x32xf32>
    %86 = arith.truncf %85 : vector<16x32xf32> to vector<16x32xbf16>
    %cst_11 = arith.constant dense<0.000000e+00> : vector<16x32xf32>
    %87 = tpu.matmul %86, %84, %cst_11 {dimension_numbers = #tpu.dot_dimension_numbers<[1], [0], [0], [1], [0, 0, 1, 1], [], []>} : vector<16x32xbf16>, vector<32x32xbf16>, vector<16x32xf32> -> vector<16x32xf32>
    %c0_12 = arith.constant 0 : index
    %c0_13 = arith.constant 0 : index
    %88 = vector.load %arg6[%c0_12, %c0_13] : memref<1x32xf32, #tpu.memory_space<vmem>>, vector<1x32xf32>
    %89 = vector.broadcast %88 : vector<1x32xf32> to vector<16x32xf32>
    %90 = arith.addf %87, %89 : vector<16x32xf32>
    %cst_14 = arith.constant 0.000000e+00 : f32
    %91 = vector.broadcast %cst_14 : f32 to vector<16x32xf32>
    %92 = arith.maximumf %90, %91 : vector<16x32xf32>
    %93 = arith.truncf %92 : vector<16x32xf32> to vector<16x32xbf16>
    %c0_15 = arith.constant 0 : index
    %c0_16 = arith.constant 0 : index
    %94 = vector.load %arg7[%c0_15, %c0_16] : memref<32x32xbf16, #tpu.memory_space<vmem>>, vector<32x32xbf16>
    %cst_17 = arith.constant dense<0.000000e+00> : vector<16x32xf32>
    %95 = tpu.matmul %3, %93, %cst_17 {dimension_numbers = #tpu.dot_dimension_numbers<[1], [0], [0], [1], [0, 0, 1, 1], [], []>} : vector<16x16xbf16>, vector<16x32xbf16>, vector<16x32xf32> -> vector<16x32xf32>
    %96 = arith.truncf %95 : vector<16x32xf32> to vector<16x32xbf16>
    %cst_18 = arith.constant dense<0.000000e+00> : vector<16x32xf32>
    %97 = tpu.matmul %96, %94, %cst_18 {dimension_numbers = #tpu.dot_dimension_numbers<[1], [0], [0], [1], [0, 0, 1, 1], [], []>} : vector<16x32xbf16>, vector<32x32xbf16>, vector<16x32xf32> -> vector<16x32xf32>
    %c0_19 = arith.constant 0 : index
    %c0_20 = arith.constant 0 : index
    %98 = vector.load %arg8[%c0_19, %c0_20] : memref<1x32xf32, #tpu.memory_space<vmem>>, vector<1x32xf32>
    %99 = vector.broadcast %98 : vector<1x32xf32> to vector<16x32xf32>
    %100 = arith.addf %97, %99 : vector<16x32xf32>
    %cst_21 = arith.constant 0.000000e+00 : f32
    %101 = vector.broadcast %cst_21 : f32 to vector<16x32xf32>
    %102 = arith.maximumf %100, %101 : vector<16x32xf32>
    %103 = tpu.iota {dimensions = array<i32: 0>} : vector<16x32xi32>
    %104 = vector.broadcast %1 : i32 to vector<16x32xi32>
    %105 = arith.cmpi slt, %103, %104 : vector<16x32xi32>
    %106 = arith.extui %105 : vector<16x32xi1> to vector<16x32xi32>
    %107 = arith.sitofp %106 : vector<16x32xi32> to vector<16x32xf32>
    %108 = arith.mulf %102, %107 : vector<16x32xf32>
    %cst_22 = arith.constant dense<0.000000e+00> : vector<32xf32>
    %109 = vector.multi_reduction <add>, %108, %cst_22 [0] : vector<16x32xf32> to vector<32xf32>
    %110 = vector.shape_cast %109 : vector<32xf32> to vector<1x32xf32>
    %111 = arith.sitofp %1 : i32 to f32
    %112 = vector.broadcast %111 : f32 to vector<1x32xf32>
    %113 = arith.divf %110, %112 : vector<1x32xf32>
    %c0_23 = arith.constant 0 : index
    %c0_24 = arith.constant 0 : index
    %114 = vector.load %arg9[%c0_23, %c0_24] : memref<1x32xf32, #tpu.memory_space<vmem>>, vector<1x32xf32>
    %115 = arith.mulf %113, %114 : vector<1x32xf32>
    %cst_25 = arith.constant dense<0.000000e+00> : vector<1xf32>
    %116 = vector.multi_reduction <add>, %115, %cst_25 [1] : vector<1x32xf32> to vector<1xf32>
    %117 = vector.shape_cast %116 : vector<1xf32> to vector<1x1xf32>
    %c0_26 = arith.constant 0 : index
    %c0_27 = arith.constant 0 : index
    %118 = vector.load %arg10[%c0_26, %c0_27] : memref<1x1xf32, #tpu.memory_space<vmem>>, vector<1x1xf32>
    %119 = arith.addf %117, %118 : vector<1x1xf32>
    %120 = vector.shape_cast %119 : vector<1x1xf32> to vector<1x1x1xf32>
    %c0_28 = arith.constant 0 : index
    %c0_29 = arith.constant 0 : index
    %c0_30 = arith.constant 0 : index
    %121 = vector.load %arg11[%c0_28, %c0_29, %c0_30] : memref<1x1x1xf32, #tpu.memory_space<vmem>>, vector<1x1x1xf32>
    tpu.vector_store %arg11[%c0_28, %c0_29, %c0_30], %120 {strides = array<i32>} : memref<1x1x1xf32, #tpu.memory_space<vmem>>, vector<1x1x1xf32>,
    return
  }
  func.func @transform_0(%arg0: i32, %arg1: memref<8xi32, #tpu.memory_space<smem>>) -> (i32, i32, i32) {
    %c0_i32 = arith.constant 0 : i32
    %c0_i32_0 = arith.constant 0 : i32
    %c0_i32_1 = arith.constant 0 : i32
    return %arg0, %c0_i32, %c0_i32_0 : i32, i32, i32
  }
  func.func @transform_1(%arg0: i32, %arg1: memref<8xi32, #tpu.memory_space<smem>>) -> (i32, i32, i32) {
    %c0_i32 = arith.constant 0 : i32
    %c0_i32_0 = arith.constant 0 : i32
    %c0_i32_1 = arith.constant 0 : i32
    return %arg0, %c0_i32, %c0_i32_0 : i32, i32, i32
  }
  func.func @transform_2(%arg0: i32, %arg1: memref<8xi32, #tpu.memory_space<smem>>) -> (i32, i32) {
    %c0_i32 = arith.constant 0 : i32
    %c0_i32_0 = arith.constant 0 : i32
    %c0_i32_1 = arith.constant 0 : i32
    return %c0_i32, %c0_i32_0 : i32, i32
  }
  func.func @transform_3(%arg0: i32, %arg1: memref<8xi32, #tpu.memory_space<smem>>) -> (i32, i32) {
    %c0_i32 = arith.constant 0 : i32
    %c0_i32_0 = arith.constant 0 : i32
    %c0_i32_1 = arith.constant 0 : i32
    return %c0_i32, %c0_i32_0 : i32, i32
  }
  func.func @transform_4(%arg0: i32, %arg1: memref<8xi32, #tpu.memory_space<smem>>) -> (i32, i32) {
    %c0_i32 = arith.constant 0 : i32
    %c0_i32_0 = arith.constant 0 : i32
    %c0_i32_1 = arith.constant 0 : i32
    return %c0_i32, %c0_i32_0 : i32, i32
  }
  func.func @transform_5(%arg0: i32, %arg1: memref<8xi32, #tpu.memory_space<smem>>) -> (i32, i32) {
    %c0_i32 = arith.constant 0 : i32
    %c0_i32_0 = arith.constant 0 : i32
    %c0_i32_1 = arith.constant 0 : i32
    return %c0_i32, %c0_i32_0 : i32, i32
  }
  func.func @transform_6(%arg0: i32, %arg1: memref<8xi32, #tpu.memory_space<smem>>) -> (i32, i32) {
    %c0_i32 = arith.constant 0 : i32
    %c0_i32_0 = arith.constant 0 : i32
    %c0_i32_1 = arith.constant 0 : i32
    return %c0_i32, %c0_i32_0 : i32, i32
  }
  func.func @transform_7(%arg0: i32, %arg1: memref<8xi32, #tpu.memory_space<smem>>) -> (i32, i32) {
    %c0_i32 = arith.constant 0 : i32
    %c0_i32_0 = arith.constant 0 : i32
    %c0_i32_1 = arith.constant 0 : i32
    return %c0_i32, %c0_i32_0 : i32, i32
  }
  func.func @transform_8(%arg0: i32, %arg1: memref<8xi32, #tpu.memory_space<smem>>) -> (i32, i32) {
    %c0_i32 = arith.constant 0 : i32
    %c0_i32_0 = arith.constant 0 : i32
    %c0_i32_1 = arith.constant 0 : i32
    return %c0_i32, %c0_i32_0 : i32, i32
  }
  func.func @transform_9(%arg0: i32, %arg1: memref<8xi32, #tpu.memory_space<smem>>) -> (i32, i32, i32) {
    %c0_i32 = arith.constant 0 : i32
    %c0_i32_0 = arith.constant 0 : i32
    %c0_i32_1 = arith.constant 0 : i32
    return %arg0, %c0_i32, %c0_i32_0 : i32, i32, i32
  }
}

</mosaic_0001>

<llo_original>
// kernel: tpu_custom_call.1
$region0: #{tpu_custom_call.1}
  #allocation0 [shape = 'u32[]', space=smem, size = 0x4, offset = 0x4, fixed_abs, tag = 'smem constant byte address 0x4 - core index']
  #allocation1 [shape = 'u32[72,128]{1,0:T(1,128)}', space=vmem, size = 0x9000, scoped, tag = 'internal scratch']
  #allocation2 [shape = 's32[1]{0}', space=sflag, size = 0x4, scoped, tag = 'scoped memory for tpu_custom_call.1']
  #allocation3 [shape = 'u8[512]{0}', space=smem, size = 0x200, scoped, tag = 'prefetched SMEM operand 0']
  #allocation4 [shape = 'f32[1,1]{1,0:T(1,128)S(1)}', space=vmem, size = 0x200, scoped, tag = 'scoped memory for tpu_custom_call.1']
  %s0 = inlined_call_operand.vmem [shape: s32[8], index: 0, kind: input, shape index: {}]
  %s1 = inlined_call_operand.vmem [shape: bf16[8,16,16], index: 1, kind: input, shape index: {}]
  %s2 = inlined_call_operand.vmem [shape: s32[8,16,9], index: 2, kind: input, shape index: {}]
  %s3 = inlined_call_operand.vmem [shape: bf16[144,32], index: 3, kind: input, shape index: {}]
  %s4 = inlined_call_operand.vmem [shape: bf16[32,32], index: 4, kind: input, shape index: {}]
  %s5 = inlined_call_operand.vmem [shape: f32[1,32], index: 5, kind: input, shape index: {}]
  %s6 = inlined_call_operand.vmem [shape: bf16[32,32], index: 6, kind: input, shape index: {}]
  %s7 = inlined_call_operand.vmem [shape: f32[1,32], index: 7, kind: input, shape index: {}]
  %s8 = inlined_call_operand.vmem [shape: f32[1,32], index: 8, kind: input, shape index: {}]
  %s9 = inlined_call_operand.<no memory space> [shape: f32[1,1], index: 9, kind: input, shape index: {}]
  %s10 = inlined_call_operand.vmem [shape: f32[8,1,1], index: 10, kind: output, shape index: {}]
  %s11 = sld [smem:[#allocation0]]
  $region69: #{tpu_custom_call.1} parent=0
    _
  %s13 = ssub.s32 1, %s11
  %s14 = scalar_select 0, %s13, %s11
  %s16 = sshll.u32 %s0, 4
  %s17 = int_to_ptr.vmem [resolvable:$true] %s16
  %19 = dma.vmem_to_smem %s17, 16, [#allocation3], [#allocation2]
  %v20 = vstv %s9
  %21 = vst [vmem:[#allocation4] sm:$0x1] %v20
  %23 = dma.done [#allocation2], 16
  %24 = sfence
  loop: start=0, step=1, limit=10
  $region2: #{tpu_custom_call.1} parent=0 // loop_pre_header
    _
  $region3: #{tpu_custom_call.1} parent=0 // loop_header
    %s26 = sphi 0, %s30
    %p27 = scmp.ge.s32.totalorder %s26, 10
    %s36 = sphi 0, %s38
    %s39 = sphi 0, %s36
    %s40 = sphi 0, %s39
    %s56 = sphi 0, %s40
    %s62 = sphi 0, %s64
    %s65 = sphi 0, %s62
    %s66 = sphi 0, %s65
    %s82 = sphi 0, %s66
    %s86 = sphi 0, %s86
    %s88 = sphi 0, %s86
    %s89 = sphi 0, %s88
    %s103 = sphi 0, %s89
    %s107 = sphi 0, %s107
    %s109 = sphi 0, %s107
    %s110 = sphi 0, %s109
    %s124 = sphi 0, %s110
    %s128 = sphi 0, %s128
    %s130 = sphi 0, %s128
    %s131 = sphi 0, %s130
    %s145 = sphi 0, %s131
    %s149 = sphi 0, %s149
    %s151 = sphi 0, %s149
    %s152 = sphi 0, %s151
    %s166 = sphi 0, %s152
    %s170 = sphi 0, %s170
    %s172 = sphi 0, %s170
    %s173 = sphi 0, %s172
    %s187 = sphi 0, %s173
    %s191 = sphi 0, %s191
    %s193 = sphi 0, %s191
    %s194 = sphi 0, %s193
    %s208 = sphi 0, %s194
    %s212 = sphi 0, %s212
    %s214 = sphi 0, %s212
    %s215 = sphi 0, %s214
    %s229 = sphi 0, %s215
    %s235 = sphi 0, %s237
    %s238 = sphi 0, %s235
    %s239 = sphi 0, %s238
    %s255 = sphi 0, %s239
  $region4: #{tpu_custom_call.1} parent=0 // loop_header_branch
    %29 = sbr.rel (%p27) target = $region8
  $region5: #{tpu_custom_call.1} parent=0 // loop_body
    %s31 = ssub.s32 %s26, 1
    %s32 = ssub.s32 %s26, 2
    %s33 = sadd.s32 %s26, 1
    %s34 = ssub.s32 %s26, %s33
    %p35 = scmp.eq.s32.totalorder %s34, 0
    %s37 = sadd.s32 %s36, 1
    %s38 = scalar_select %p35, %s36, %s37
    %p41 = pneg %p35
    %p42 = scmp.eq.s32.totalorder %s26, 7
    %p43 = por %p41, %p42
    %p44 = scmp.ne.s32.totalorder %s36, %s39
    %p45 = scmp.eq.s32.totalorder %s26, 0
    %p46 = por %p44, %p45
    %p47 = scmp.ne.s32.totalorder %s36, %s39
    %p48 = scmp.eq.s32.totalorder %s31, 7
    %p49 = por %p47, %p48
    %p50 = scmp.ne.s32.totalorder %s39, %s40
    %p51 = scmp.eq.s32.totalorder %s31, 0
    %p52 = por %p50, %p51
    %p53 = scmp.ne.s32.totalorder %s39, %s40
    %p54 = scmp.eq.s32.totalorder %s32, 7
    %p55 = por %p53, %p54
    %p57 = scmp.ne.s32.totalorder %s40, %s56
    %p58 = scmp.eq.s32.totalorder %s32, 0
    %p59 = por %p57, %p58
    %s60 = ssub.s32 %s26, %s33
    %p61 = scmp.eq.s32.totalorder %s60, 0
    %s63 = sadd.s32 %s62, 1
    %s64 = scalar_select %p61, %s62, %s63
    %p67 = pneg %p61
    %p68 = scmp.eq.s32.totalorder %s26, 7
    %p69 = por %p67, %p68
    %p70 = scmp.ne.s32.totalorder %s62, %s65
    %p71 = scmp.eq.s32.totalorder %s26, 0
    %p72 = por %p70, %p71
    %p73 = scmp.ne.s32.totalorder %s62, %s65
    %p74 = scmp.eq.s32.totalorder %s31, 7
    %p75 = por %p73, %p74
    %p76 = scmp.ne.s32.totalorder %s65, %s66
    %p77 = scmp.eq.s32.totalorder %s31, 0
    %p78 = por %p76, %p77
    %p79 = scmp.ne.s32.totalorder %s65, %s66
    %p80 = scmp.eq.s32.totalorder %s32, 7
    %p81 = por %p79, %p80
    %p83 = scmp.ne.s32.totalorder %s66, %s82
    %p84 = scmp.eq.s32.totalorder %s32, 0
    %p85 = por %p83, %p84
    %s87 = sadd.s32 %s86, 1
    %p90 = scmp.eq.s32.totalorder %s26, 7
    %p91 = scmp.ne.s32.totalorder %s86, %s88
    %p92 = scmp.eq.s32.totalorder %s26, 0
    %p93 = por %p91, %p92
    %p94 = scmp.ne.s32.totalorder %s86, %s88
    %p95 = scmp.eq.s32.totalorder %s31, 7
    %p96 = por %p94, %p95
    %p97 = scmp.ne.s32.totalorder %s88, %s89
    %p98 = scmp.eq.s32.totalorder %s31, 0
    %p99 = por %p97, %p98
    %p100 = scmp.ne.s32.totalorder %s88, %s89
    %p101 = scmp.eq.s32.totalorder %s32, 7
    %p102 = por %p100, %p101
    %p104 = scmp.ne.s32.totalorder %s89, %s103
    %p105 = scmp.eq.s32.totalorder %s32, 0
    %p106 = por %p104, %p105
    %s108 = sadd.s32 %s107, 1
    %p111 = scmp.eq.s32.totalorder %s26, 7
    %p112 = scmp.ne.s32.totalorder %s107, %s109
    %p113 = scmp.eq.s32.totalorder %s26, 0
    %p114 = por %p112, %p113
    %p115 = scmp.ne.s32.totalorder %s107, %s109
    %p116 = scmp.eq.s32.totalorder %s31, 7
    %p117 = por %p115, %p116
    %p118 = scmp.ne.s32.totalorder %s109, %s110
    %p119 = scmp.eq.s32.totalorder %s31, 0
    %p120 = por %p118, %p119
    %p121 = scmp.ne.s32.totalorder %s109, %s110
    %p122 = scmp.eq.s32.totalorder %s32, 7
    %p123 = por %p121, %p122
    %p125 = scmp.ne.s32.totalorder %s110, %s124
    %p126 = scmp.eq.s32.totalorder %s32, 0
    %p127 = por %p125, %p126
    %s129 = sadd.s32 %s128, 1
    %p132 = scmp.eq.s32.totalorder %s26, 7
    %p133 = scmp.ne.s32.totalorder %s128, %s130
    %p134 = scmp.eq.s32.totalorder %s26, 0
    %p135 = por %p133, %p134
    %p136 = scmp.ne.s32.totalorder %s128, %s130
    %p137 = scmp.eq.s32.totalorder %s31, 7
    %p138 = por %p136, %p137
    %p139 = scmp.ne.s32.totalorder %s130, %s131
    %p140 = scmp.eq.s32.totalorder %s31, 0
    %p141 = por %p139, %p140
    %p142 = scmp.ne.s32.totalorder %s130, %s131
    %p143 = scmp.eq.s32.totalorder %s32, 7
    %p144 = por %p142, %p143
    %p146 = scmp.ne.s32.totalorder %s131, %s145
    %p147 = scmp.eq.s32.totalorder %s32, 0
    %p148 = por %p146, %p147
    %s150 = sadd.s32 %s149, 1
    %p153 = scmp.eq.s32.totalorder %s26, 7
    %p154 = scmp.ne.s32.totalorder %s149, %s151
    %p155 = scmp.eq.s32.totalorder %s26, 0
    %p156 = por %p154, %p155
    %p157 = scmp.ne.s32.totalorder %s149, %s151
    %p158 = scmp.eq.s32.totalorder %s31, 7
    %p159 = por %p157, %p158
    %p160 = scmp.ne.s32.totalorder %s151, %s152
    %p161 = scmp.eq.s32.totalorder %s31, 0
    %p162 = por %p160, %p161
    %p163 = scmp.ne.s32.totalorder %s151, %s152
    %p164 = scmp.eq.s32.totalorder %s32, 7
    %p165 = por %p163, %p164
    %p167 = scmp.ne.s32.totalorder %s152, %s166
    %p168 = scmp.eq.s32.totalorder %s32, 0
    %p169 = por %p167, %p168
    %s171 = sadd.s32 %s170, 1
    %p174 = scmp.eq.s32.totalorder %s26, 7
    %p175 = scmp.ne.s32.totalorder %s170, %s172
    %p176 = scmp.eq.s32.totalorder %s26, 0
    %p177 = por %p175, %p176
    %p178 = scmp.ne.s32.totalorder %s170, %s172
    %p179 = scmp.eq.s32.totalorder %s31, 7
    %p180 = por %p178, %p179
    %p181 = scmp.ne.s32.totalorder %s172, %s173
    %p182 = scmp.eq.s32.totalorder %s31, 0
    %p183 = por %p181, %p182
    %p184 = scmp.ne.s32.totalorder %s172, %s173
    %p185 = scmp.eq.s32.totalorder %s32, 7
    %p186 = por %p184, %p185
    %p188 = scmp.ne.s32.totalorder %s173, %s187
    %p189 = scmp.eq.s32.totalorder %s32, 0
    %p190 = por %p188, %p189
    %s192 = sadd.s32 %s191, 1
    %p195 = scmp.eq.s32.totalorder %s26, 7
    %p196 = scmp.ne.s32.totalorder %s191, %s193
    %p197 = scmp.eq.s32.totalorder %s26, 0
    %p198 = por %p196, %p197
    %p199 = scmp.ne.s32.totalorder %s191, %s193
    %p200 = scmp.eq.s32.totalorder %s31, 7
    %p201 = por %p199, %p200
    %p202 = scmp.ne.s32.totalorder %s193, %s194
    %p203 = scmp.eq.s32.totalorder %s31, 0
    %p204 = por %p202, %p203
    %p205 = scmp.ne.s32.totalorder %s193, %s194
    %p206 = scmp.eq.s32.totalorder %s32, 7
    %p207 = por %p205, %p206
    %p209 = scmp.ne.s32.totalorder %s194, %s208
    %p210 = scmp.eq.s32.totalorder %s32, 0
    %p211 = por %p209, %p210
    %s213 = sadd.s32 %s212, 1
    %p216 = scmp.eq.s32.totalorder %s26, 7
    %p217 = scmp.ne.s32.totalorder %s212, %s214
    %p218 = scmp.eq.s32.totalorder %s26, 0
    %p219 = por %p217, %p218
    %p220 = scmp.ne.s32.totalorder %s212, %s214
    %p221 = scmp.eq.s32.totalorder %s31, 7
    %p222 = por %p220, %p221
    %p223 = scmp.ne.s32.totalorder %s214, %s215
    %p224 = scmp.eq.s32.totalorder %s31, 0
    %p225 = por %p223, %p224
    %p226 = scmp.ne.s32.totalorder %s214, %s215
    %p227 = scmp.eq.s32.totalorder %s32, 7
    %p228 = por %p226, %p227
    %p230 = scmp.ne.s32.totalorder %s215, %s229
    %p231 = scmp.eq.s32.totalorder %s32, 0
    %p232 = por %p230, %p231
    %s233 = ssub.s32 %s26, %s33
    %p234 = scmp.eq.s32.totalorder %s233, 0
    %s236 = sadd.s32 %s235, 1
    %s237 = scalar_select %p234, %s235, %s236
    %p240 = pneg %p234
    %p241 = scmp.eq.s32.totalorder %s26, 7
    %p242 = por %p240, %p241
    %p243 = scmp.ne.s32.totalorder %s235, %s238
    %p244 = scmp.eq.s32.totalorder %s26, 0
    %p245 = por %p243, %p244
    %p246 = scmp.ne.s32.totalorder %s235, %s238
    %p247 = scmp.eq.s32.totalorder %s31, 7
    %p248 = por %p246, %p247
    %p249 = scmp.ne.s32.totalorder %s238, %s239
    %p250 = scmp.eq.s32.totalorder %s31, 0
    %p251 = por %p249, %p250
    %p252 = scmp.ne.s32.totalorder %s238, %s239
    %p253 = scmp.eq.s32.totalorder %s32, 7
    %p254 = por %p252, %p253
    %p256 = scmp.ne.s32.totalorder %s239, %s255
    %p257 = scmp.eq.s32.totalorder %s32, 0
    %p258 = por %p256, %p257
    %p259 = scmp.le.s32.totalorder 1, %s26
    %p260 = scmp.lt.s32.totalorder %s26, 9
    %p261 = pnand %p259, %p260
    %p262 = pneg %p261
    // Predicated region
    $region9: #{tpu_custom_call.1} parent=5 // pred_check
      _
    $region10: #{tpu_custom_call.1} parent=5 // pred_check_branch
      %264 = sbr.rel (%p261) target = $region12
    $region11: #{tpu_custom_call.1} parent=5 // pred_region
      %s265 = ssub.s32 %s26, 1
      // Predicated region
      $region13: #{tpu_custom_call.1} parent=11 // pred_check
        %p266 = pneg %p99
      $region14: #{tpu_custom_call.1} parent=11 // pred_check_branch
        %268 = sbr.rel (%p266) target = $region16
      $region15: #{tpu_custom_call.1} parent=11 // pred_region
        _
      $region16: #{tpu_custom_call.1} parent=11 // pred_fallthru
        _
      // Predicated region
      $region17: #{tpu_custom_call.1} parent=11 // pred_check
        %p269 = pneg %p120
      $region18: #{tpu_custom_call.1} parent=11 // pred_check_branch
        %271 = sbr.rel (%p269) target = $region20
      $region19: #{tpu_custom_call.1} parent=11 // pred_region
        _
      $region20: #{tpu_custom_call.1} parent=11 // pred_fallthru
        _
      // Predicated region
      $region21: #{tpu_custom_call.1} parent=11 // pred_check
        %p272 = pneg %p141
      $region22: #{tpu_custom_call.1} parent=11 // pred_check_branch
        %274 = sbr.rel (%p272) target = $region24
      $region23: #{tpu_custom_call.1} parent=11 // pred_region
        _
      $region24: #{tpu_custom_call.1} parent=11 // pred_fallthru
        _
      // Predicated region
      $region25: #{tpu_custom_call.1} parent=11 // pred_check
        %p275 = pneg %p162
      $region26: #{tpu_custom_call.1} parent=11 // pred_check_branch
        %277 = sbr.rel (%p275) target = $region28
      $region27: #{tpu_custom_call.1} parent=11 // pred_region
        _
      $region28: #{tpu_custom_call.1} parent=11 // pred_fallthru
        _
      // Predicated region
      $region29: #{tpu_custom_call.1} parent=11 // pred_check
        %p278 = pneg %p183
      $region30: #{tpu_custom_call.1} parent=11 // pred_check_branch
        %280 = sbr.rel (%p278) target = $region32
      $region31: #{tpu_custom_call.1} parent=11 // pred_region
        _
      $region32: #{tpu_custom_call.1} parent=11 // pred_fallthru
        _
      // Predicated region
      $region33: #{tpu_custom_call.1} parent=11 // pred_check
        %p281 = pneg %p204
      $region34: #{tpu_custom_call.1} parent=11 // pred_check_branch
        %283 = sbr.rel (%p281) target = $region36
      $region35: #{tpu_custom_call.1} parent=11 // pred_region
        _
      $region36: #{tpu_custom_call.1} parent=11 // pred_fallthru
        _
      // Predicated region
      $region37: #{tpu_custom_call.1} parent=11 // pred_check
        %p284 = pneg %p225
      $region38: #{tpu_custom_call.1} parent=11 // pred_check_branch
        %286 = sbr.rel (%p284) target = $region40
      $region39: #{tpu_custom_call.1} parent=11 // pred_region
        _
      $region40: #{tpu_custom_call.1} parent=11 // pred_fallthru
        _
    $region12: #{tpu_custom_call.1} parent=5 // pred_fallthru
      _
    %p287 = scmp.lt.s32.totalorder %s26, 8
    // Predicated region
    $region41: #{tpu_custom_call.1} parent=5 // pred_check
      %p288 = pneg %p287
    $region42: #{tpu_custom_call.1} parent=5 // pred_check_branch
      %290 = sbr.rel (%p288) target = $region44
    $region43: #{tpu_custom_call.1} parent=5 // pred_region
      // Predicated region
      $region45: #{tpu_custom_call.1} parent=43 // pred_check
        %p291 = pneg %p46
      $region46: #{tpu_custom_call.1} parent=43 // pred_check_branch
        %293 = sbr.rel (%p291) target = $region48
      $region47: #{tpu_custom_call.1} parent=43 // pred_region
        %p294 = scmp.lt.s32.totalorder %s26, 7
        %s295 = scalar_select %p294, %s26, 7
        %s296 = smul.addr %s295, 2
        %s297 = smul.addr %s296, 4
        %s298 = scalar_lea.vmem %s1, %s297
      $region48: #{tpu_custom_call.1} parent=43 // pred_fallthru
        _
      // Predicated region
      $region49: #{tpu_custom_call.1} parent=43 // pred_check
        %p299 = pneg %p72
      $region50: #{tpu_custom_call.1} parent=43 // pred_check_branch
        %301 = sbr.rel (%p299) target = $region52
      $region51: #{tpu_custom_call.1} parent=43 // pred_region
        %p302 = scmp.lt.s32.totalorder %s26, 7
        %s303 = scalar_select %p302, %s26, 7
        %s304 = smul.addr %s303, 2
        %s305 = smul.addr %s304, 8
        %s306 = scalar_lea.vmem %s2, %s305
      $region52: #{tpu_custom_call.1} parent=43 // pred_fallthru
        _
    $region44: #{tpu_custom_call.1} parent=5 // pred_fallthru
      _
    %p307 = scmp.le.s32.totalorder 1, %s26
    %p308 = scmp.lt.s32.totalorder %s26, 9
    %p309 = pnand %p307, %p308
    %p310 = pneg %p309
    // Predicated region
    $region53: #{tpu_custom_call.1} parent=5 // pred_check
      _
    $region54: #{tpu_custom_call.1} parent=5 // pred_check_branch
      %312 = sbr.rel (%p309) target = $region56
    $region55: #{tpu_custom_call.1} parent=5 // pred_region
      %s313 = ssub.s32 %s26, 1
      %p314 = scmp.lt.s32.totalorder %s31, 7
      %s315 = scalar_select %p314, %s31, 7
      %s316 = smul.addr %s315, 2
      %s317 = smul.addr %s316, 4
      %s318 = scalar_lea.vmem %s1, %s317
      %p319 = pneg %p52
      %p320 = pneg %p49
      %p321 = scmp.lt.s32.totalorder %s31, 7
      %s322 = scalar_select %p321, %s31, 7
      %s323 = smul.addr %s322, 2
      %s324 = smul.addr %s323, 8
      %s325 = scalar_lea.vmem %s2, %s324
      %p326 = pneg %p78
      %p327 = pneg %p75
      %p328 = pneg %p99
      %p329 = pneg %p96
      %p330 = pneg %p120
      %p331 = pneg %p117
      %p332 = pneg %p141
      %p333 = pneg %p138
      %p334 = pneg %p162
      %p335 = pneg %p159
      %p336 = pneg %p183
      %p337 = pneg %p180
      %p338 = pneg %p204
      %p339 = pneg %p201
      %p340 = pneg %p225
      %p341 = pneg %p222
      %p342 = pneg %p251
      %p343 = pneg %p248
      %p344 = scmp.lt.s32.totalorder %s31, 7
      %s345 = scalar_select %p344, %s31, 7
      %s346 = scalar_lea.vmem %s10, %s345
      %p347 = scmp.lt.s32.totalorder %s31, 7
      %s348 = scalar_select %p347, %s31, 7
      %s349 = smul.addr %s348, 2
      %s350 = smul.addr %s349, 4
      %s351 = scalar_lea.vmem %s1, %s350
      %p352 = scmp.lt.s32.totalorder %s31, 7
      %s353 = scalar_select %p352, %s31, 7
      %s354 = smul.addr %s353, 2
      %s355 = smul.addr %s354, 8
      %s356 = scalar_lea.vmem %s2, %s355
      %p357 = scmp.lt.s32.totalorder %s31, 7
      %s358 = scalar_select %p357, %s31, 7
      %s359 = scalar_lea.vmem %s10, %s358
      %s361 = sld [smem:[#allocation3 + %s31]]
      %v362 = vld [vmem:[%s351] sm:$0xf]
      %v363 = vld [vmem:[%s351 + $0x4] sm:$0xf]
      %v364 = vld [vmem:[%s356] sm:$0xff]
      %v365 = vld [vmem:[%s356 + $0x8] sm:$0xff]
      %v366 = vlaneseq
      %v367 = vand.u32 %v366, 127
      %v368 = vadd.s32 %v367, 128
      %369 = vset.pattern.permute.xlu0 0
      %370 = vperm.xlu0 %369, %v364
      %v371 = vpop.permute.xlu0 %370
      %372 = vset.pattern.permute.xlu0 0
      %373 = vperm.xlu0 %372, %v365
      %v374 = vpop.permute.xlu0 %373
      %vm375 = vcmp.eq.s32.totalorder %v367, %v371
      %vm376 = vcmp.eq.s32.totalorder %v368, %v371
      %vm377 = vcmp.eq.s32.totalorder %v367, %v374
      %vm378 = vcmp.eq.s32.totalorder %v368, %v374
      %v379 = vsel %vm375, 1, 0
      %v380 = vsel %vm376, 1, 0
      %v381 = vsel %vm377, 1, 0
      %v382 = vsel %vm378, 1, 0
      %v383 = vcvt.s32.f32 %v379
      %v384 = vcvt.s32.f32 %v380
      %v385 = vcvt.s32.f32 %v381
      %v386 = vcvt.s32.f32 %v382
      %v387 = vadd.f32 %v383, 0.0
      %v388 = vadd.f32 %v384, 0.0
      %v389 = vadd.f32 %v385, 0.0
      %v390 = vadd.f32 %v386, 0.0
      %v391 = vadd.s32 %v364, 16
      %v392 = vadd.s32 %v365, 16
      %393 = vset.pattern.permute.xlu0 1
      %394 = vperm.xlu0 %393, %v391
      %v395 = vpop.permute.xlu0 %394
      %396 = vset.pattern.permute.xlu0 1
      %397 = vperm.xlu0 %396, %v392
      %v398 = vpop.permute.xlu0 %397
      %vm399 = vcmp.eq.s32.totalorder %v367, %v395
      %vm400 = vcmp.eq.s32.totalorder %v368, %v395
      %vm401 = vcmp.eq.s32.totalorder %v367, %v398
      %vm402 = vcmp.eq.s32.totalorder %v368, %v398
      %v403 = vsel %vm399, 1, 0
      %v404 = vsel %vm400, 1, 0
      %v405 = vsel %vm401, 1, 0
      %v406 = vsel %vm402, 1, 0
      %v407 = vcvt.s32.f32 %v403
      %v408 = vcvt.s32.f32 %v404
      %v409 = vcvt.s32.f32 %v405
      %v410 = vcvt.s32.f32 %v406
      %v411 = vadd.f32 %v387, %v407
      %v412 = vadd.f32 %v388, %v408
      %v413 = vadd.f32 %v389, %v409
      %v414 = vadd.f32 %v390, %v410
      %v415 = vadd.s32 %v364, 32
      %v416 = vadd.s32 %v365, 32
      %417 = vset.pattern.permute.xlu0 2
      %418 = vperm.xlu0 %417, %v415
      %v419 = vpop.permute.xlu0 %418
      %420 = vset.pattern.permute.xlu0 2
      %421 = vperm.xlu0 %420, %v416
      %v422 = vpop.permute.xlu0 %421
      %vm423 = vcmp.eq.s32.totalorder %v367, %v419
      %vm424 = vcmp.eq.s32.totalorder %v368, %v419
      %vm425 = vcmp.eq.s32.totalorder %v367, %v422
      %vm426 = vcmp.eq.s32.totalorder %v368, %v422
      %v427 = vsel %vm423, 1, 0
      %v428 = vsel %vm424, 1, 0
      %v429 = vsel %vm425, 1, 0
      %v430 = vsel %vm426, 1, 0
      %v431 = vcvt.s32.f32 %v427
      %v432 = vcvt.s32.f32 %v428
      %v433 = vcvt.s32.f32 %v429
      %v434 = vcvt.s32.f32 %v430
      %v435 = vadd.f32 %v411, %v431
      %v436 = vadd.f32 %v412, %v432
      %v437 = vadd.f32 %v413, %v433
      %v438 = vadd.f32 %v414, %v434
      %v439 = vadd.s32 %v364, 48
      %v440 = vadd.s32 %v365, 48
      %441 = vset.pattern.permute.xlu0 3
      %442 = vperm.xlu0 %441, %v439
      %v443 = vpop.permute.xlu0 %442
      %444 = vset.pattern.permute.xlu0 3
      %445 = vperm.xlu0 %444, %v440
      %v446 = vpop.permute.xlu0 %445
      %vm447 = vcmp.eq.s32.totalorder %v367, %v443
      %vm448 = vcmp.eq.s32.totalorder %v368, %v443
      %vm449 = vcmp.eq.s32.totalorder %v367, %v446
      %vm450 = vcmp.eq.s32.totalorder %v368, %v446
      %v451 = vsel %vm447, 1, 0
      %v452 = vsel %vm448, 1, 0
      %v453 = vsel %vm449, 1, 0
      %v454 = vsel %vm450, 1, 0
      %v455 = vcvt.s32.f32 %v451
      %v456 = vcvt.s32.f32 %v452
      %v457 = vcvt.s32.f32 %v453
      %v458 = vcvt.s32.f32 %v454
      %v459 = vadd.f32 %v435, %v455
      %v460 = vadd.f32 %v436, %v456
      %v461 = vadd.f32 %v437, %v457
      %v462 = vadd.f32 %v438, %v458
      %v463 = vadd.s32 %v364, 64
      %v464 = vadd.s32 %v365, 64
      %465 = vset.pattern.permute.xlu0 4
      %466 = vperm.xlu0 %465, %v463
      %v467 = vpop.permute.xlu0 %466
      %468 = vset.pattern.permute.xlu0 4
      %469 = vperm.xlu0 %468, %v464
      %v470 = vpop.permute.xlu0 %469
      %vm471 = vcmp.eq.s32.totalorder %v367, %v467
      %vm472 = vcmp.eq.s32.totalorder %v368, %v467
      %vm473 = vcmp.eq.s32.totalorder %v367, %v470
      %vm474 = vcmp.eq.s32.totalorder %v368, %v470
      %v475 = vsel %vm471, 1, 0
      %v476 = vsel %vm472, 1, 0
      %v477 = vsel %vm473, 1, 0
      %v478 = vsel %vm474, 1, 0
      %v479 = vcvt.s32.f32 %v475
      %v480 = vcvt.s32.f32 %v476
      %v481 = vcvt.s32.f32 %v477
      %v482 = vcvt.s32.f32 %v478
      %v483 = vadd.f32 %v459, %v479
      %v484 = vadd.f32 %v460, %v480
      %v485 = vadd.f32 %v461, %v481
      %v486 = vadd.f32 %v462, %v482
      %v487 = vadd.s32 %v364, 80
      %v488 = vadd.s32 %v365, 80
      %489 = vset.pattern.permute.xlu0 5
      %490 = vperm.xlu0 %489, %v487
      %v491 = vpop.permute.xlu0 %490
      %492 = vset.pattern.permute.xlu0 5
      %493 = vperm.xlu0 %492, %v488
      %v494 = vpop.permute.xlu0 %493
      %vm495 = vcmp.eq.s32.totalorder %v367, %v491
      %vm496 = vcmp.eq.s32.totalorder %v368, %v491
      %vm497 = vcmp.eq.s32.totalorder %v367, %v494
      %vm498 = vcmp.eq.s32.totalorder %v368, %v494
      %v499 = vsel %vm495, 1, 0
      %v500 = vsel %vm496, 1, 0
      %v501 = vsel %vm497, 1, 0
      %v502 = vsel %vm498, 1, 0
      %v503 = vcvt.s32.f32 %v499
      %v504 = vcvt.s32.f32 %v500
      %v505 = vcvt.s32.f32 %v501
      %v506 = vcvt.s32.f32 %v502
      %v507 = vadd.f32 %v483, %v503
      %v508 = vadd.f32 %v484, %v504
      %v509 = vadd.f32 %v485, %v505
      %v510 = vadd.f32 %v486, %v506
      %v511 = vadd.s32 %v364, 96
      %v512 = vadd.s32 %v365, 96
      %513 = vset.pattern.permute.xlu0 6
      %514 = vperm.xlu0 %513, %v511
      %v515 = vpop.permute.xlu0 %514
      %516 = vset.pattern.permute.xlu0 6
      %517 = vperm.xlu0 %516, %v512
      %v518 = vpop.permute.xlu0 %517
      %vm519 = vcmp.eq.s32.totalorder %v367, %v515
      %vm520 = vcmp.eq.s32.totalorder %v368, %v515
      %vm521 = vcmp.eq.s32.totalorder %v367, %v518
      %vm522 = vcmp.eq.s32.totalorder %v368, %v518
      %v523 = vsel %vm519, 1, 0
      %v524 = vsel %vm520, 1, 0
      %v525 = vsel %vm521, 1, 0
      %v526 = vsel %vm522, 1, 0
      %v527 = vcvt.s32.f32 %v523
      %v528 = vcvt.s32.f32 %v524
      %v529 = vcvt.s32.f32 %v525
      %v530 = vcvt.s32.f32 %v526
      %v531 = vadd.f32 %v507, %v527
      %v532 = vadd.f32 %v508, %v528
      %v533 = vadd.f32 %v509, %v529
      %v534 = vadd.f32 %v510, %v530
      %v535 = vadd.s32 %v364, 112
      %v536 = vadd.s32 %v365, 112
      %537 = vset.pattern.permute.xlu0 7
      %538 = vperm.xlu0 %537, %v535
      %v539 = vpop.permute.xlu0 %538
      %540 = vset.pattern.permute.xlu0 7
      %541 = vperm.xlu0 %540, %v536
      %v542 = vpop.permute.xlu0 %541
      %vm543 = vcmp.eq.s32.totalorder %v367, %v539
      %vm544 = vcmp.eq.s32.totalorder %v368, %v539
      %vm545 = vcmp.eq.s32.totalorder %v367, %v542
      %vm546 = vcmp.eq.s32.totalorder %v368, %v542
      %v547 = vsel %vm543, 1, 0
      %v548 = vsel %vm544, 1, 0
      %v549 = vsel %vm545, 1, 0
      %v550 = vsel %vm546, 1, 0
      %v551 = vcvt.s32.f32 %v547
      %v552 = vcvt.s32.f32 %v548
      %v553 = vcvt.s32.f32 %v549
      %v554 = vcvt.s32.f32 %v550
      %v555 = vadd.f32 %v531, %v551
      %v556 = vadd.f32 %v532, %v552
      %v557 = vadd.f32 %v533, %v553
      %v558 = vadd.f32 %v534, %v554
      %v559 = vadd.s32 %v364, 128
      %v560 = vadd.s32 %v365, 128
      %561 = vset.pattern.permute.xlu0 8
      %562 = vperm.xlu0 %561, %v559
      %v563 = vpop.permute.xlu0 %562
      %564 = vset.pattern.permute.xlu0 8
      %565 = vperm.xlu0 %564, %v560
      %v566 = vpop.permute.xlu0 %565
      %vm567 = vcmp.eq.s32.totalorder %v367, %v563
      %vm568 = vcmp.eq.s32.totalorder %v368, %v563
      %vm569 = vcmp.eq.s32.totalorder %v367, %v566
      %vm570 = vcmp.eq.s32.totalorder %v368, %v566
      %v571 = vsel %vm567, 1, 0
      %v572 = vsel %vm568, 1, 0
      %v573 = vsel %vm569, 1, 0
      %v574 = vsel %vm570, 1, 0
      %v575 = vcvt.s32.f32 %v571
      %v576 = vcvt.s32.f32 %v572
      %v577 = vcvt.s32.f32 %v573
      %v578 = vcvt.s32.f32 %v574
      %v579 = vadd.f32 %v555, %v575
      %v580 = vadd.f32 %v556, %v576
      %v581 = vadd.f32 %v557, %v577
      %v582 = vadd.f32 %v558, %v578
      %v583 = vpack.c.bf16 %v581, %v579
      %v584 = vpack.c.bf16 %v582, %v580
      %v585 = vld [vmem:[%s3] sm:$0xf]
      %v586 = vld [vmem:[%s3 + $0x4] sm:$0xf]
      %v587 = vld [vmem:[%s3 + $0x8] sm:$0xf]
      %v588 = vld [vmem:[%s3 + $0xc] sm:$0xf]
      %v589 = vld [vmem:[%s3 + $0x10] sm:$0xf]
      %v590 = vld [vmem:[%s3 + $0x14] sm:$0xf]
      %v591 = vld [vmem:[%s3 + $0x18] sm:$0xf]
      %v592 = vld [vmem:[%s3 + $0x1c] sm:$0xf]
      %v593 = vld [vmem:[%s3 + $0x20] sm:$0xf]
      %v594 = vld [vmem:[%s3 + $0x24] sm:$0xf]
      %v595 = vld [vmem:[%s3 + $0x28] sm:$0xf]
      %v596 = vld [vmem:[%s3 + $0x2c] sm:$0xf]
      %v597 = vld [vmem:[%s3 + $0x30] sm:$0xf]
      %v598 = vld [vmem:[%s3 + $0x34] sm:$0xf]
      %v599 = vld [vmem:[%s3 + $0x38] sm:$0xf]
      %v600 = vld [vmem:[%s3 + $0x3c] sm:$0xf]
      %v601 = vld [vmem:[%s3 + $0x40] sm:$0xf]
      %v602 = vld [vmem:[%s3 + $0x44] sm:$0xf]
      %v621 = vunpack.c.l.b16 %v585
      %v622 = vunpack.c.l.b16 %v586
      %v623 = vunpack.c.l.b16 %v587
      %v624 = vunpack.c.l.b16 %v588
      %v625 = vunpack.c.l.b16 %v589
      %v626 = vunpack.c.l.b16 %v590
      %v627 = vunpack.c.l.b16 %v591
      %v628 = vunpack.c.l.b16 %v592
      %v629 = vunpack.c.l.b16 %v593
      %v630 = vunpack.c.l.b16 %v594
      %v631 = vunpack.c.l.b16 %v595
      %v632 = vunpack.c.l.b16 %v596
      %v633 = vunpack.c.l.b16 %v597
      %v634 = vunpack.c.l.b16 %v598
      %v635 = vunpack.c.l.b16 %v599
      %v636 = vunpack.c.l.b16 %v600
      %v637 = vunpack.c.l.b16 %v601
      %v638 = vunpack.c.l.b16 %v602
      %v639 = vpack.c.b16 %v622, %v621
      %v640 = vpack.c.b16 %v624, %v623
      %v641 = vpack.c.b16 %v626, %v625
      %v642 = vpack.c.b16 %v628, %v627
      %v643 = vpack.c.b16 %v630, %v629
      %v644 = vpack.c.b16 %v632, %v631
      %v645 = vpack.c.b16 %v634, %v633
      %v646 = vpack.c.b16 %v636, %v635
      %v647 = vpack.c.b16 %v638, %v637
      %vm657 = vcmask 130048
      %v659 = vsel %vm657, %v584, 0
      %661 = vmatpush.bf16.msra.mxu0 %v646
      %662 = vmatpush.bf16.msra.mxu0 %v645
      %663 = vmatpush.bf16.msra.mxu0 %v644
      %664 = vmatpush.bf16.msra.mxu0 %v643
      %665 = vmatpush.bf16.msra.mxu0 %v642
      %666 = vmatpush.bf16.msra.mxu0 %v641
      %667 = vmatpush.bf16.msra.mxu0 %v640
      %668 = vmatpush.bf16.msra.mxu0 %v639
      %669 = vmatmul.bf16.gmra.mxu0 %v583
      %v670 = vpop.f32.mrf.mxu0
      %v671 = vadd.f32 0.0, %v670
      %v672 = vpop.f32.mrf.mxu0
      %v673 = vadd.f32 0.0, %v672
      %674 = vdwg.mxu0
      %675 = vmatpush.bf16.msra.mxu0 0
      %676 = vmatpush.bf16.msra.mxu0 0
      %677 = vmatpush.bf16.msra.mxu0 0
      %678 = vmatpush.bf16.msra.mxu0 0
      %679 = vmatpush.bf16.msra.mxu0 0
      %680 = vmatpush.bf16.msra.mxu0 0
      %681 = vmatpush.bf16.msra.mxu0 0
      %682 = vmatpush.bf16.msra.mxu0 %v647
      %683 = vmatmul.bf16.gmra.mxu0 %v659
      %v684 = vpop.f32.mrf.mxu0
      %v685 = vadd.f32 %v671, %v684
      %v686 = vpop.f32.mrf.mxu0
      %v687 = vadd.f32 %v673, %v686
      %688 = vdwg.mxu0
      %v689 = vpack.c.bf16 %v687, %v685
      %v690 = vld [vmem:[%s4] sm:$0xf]
      %v691 = vld [vmem:[%s4 + $0x4] sm:$0xf]
      %v692 = vld [vmem:[%s4 + $0x8] sm:$0xf]
      %v693 = vld [vmem:[%s4 + $0xc] sm:$0xf]
      %v696 = vunpack.c.l.b16 %v362
      %v697 = vunpack.c.l.b16 %v363
      %v698 = vpack.c.b16 %v697, %v696
      %v700 = vsel %vm657, %v698, 0
      %702 = vmatpush.bf16.msra.mxu0 0
      %703 = vmatpush.bf16.msra.mxu0 0
      %704 = vmatpush.bf16.msra.mxu0 0
      %705 = vmatpush.bf16.msra.mxu0 0
      %706 = vmatpush.bf16.msra.mxu0 0
      %707 = vmatpush.bf16.msra.mxu0 0
      %708 = vmatpush.bf16.msra.mxu0 0
      %709 = vmatpush.bf16.msra.mxu0 %v689
      %710 = vmatmul.bf16.gmra.mxu0 %v700
      %v711 = vpop.f32.mrf.mxu0
      %v712 = vadd.f32 0.0, %v711
      %v713 = vpop.f32.mrf.mxu0
      %v714 = vadd.f32 0.0, %v713
      %715 = vdwg.mxu0
      %v716 = vpack.c.bf16 %v714, %v712
      %v717 = vld [vmem:[%s5] sm:$0x1]
      %v719 = vperm.slane %v717, 0
      %v725 = vunpack.c.l.b16 %v690
      %v726 = vunpack.c.l.b16 %v691
      %v727 = vunpack.c.l.b16 %v692
      %v728 = vunpack.c.l.b16 %v693
      %v729 = vpack.c.b16 %v726, %v725
      %v730 = vpack.c.b16 %v728, %v727
      %vm733 = vcmask 261120
      %v735 = vsel %vm733, %v716, 0
      %737 = vmatpush.bf16.msra.mxu0 0
      %738 = vmatpush.bf16.msra.mxu0 0
      %739 = vmatpush.bf16.msra.mxu0 0
      %740 = vmatpush.bf16.msra.mxu0 0
      %741 = vmatpush.bf16.msra.mxu0 0
      %742 = vmatpush.bf16.msra.mxu0 0
      %743 = vmatpush.bf16.msra.mxu0 %v730
      %744 = vmatpush.bf16.msra.mxu0 %v729
      %745 = vmatmul.bf16.gmra.mxu0 %v735
      %v746 = vpop.f32.mrf.mxu0
      %v747 = vadd.f32 %v719, %v746
      %v748 = vpop.f32.mrf.mxu0
      %v749 = vadd.f32 %v719, %v748
      %750 = vdwg.mxu0
      %v751 = vmax.f32 %v747, 0.0
      %v752 = vmax.f32 %v749, 0.0
      %v753 = vpack.c.bf16 %v752, %v751
      %v754 = vld [vmem:[%s6] sm:$0xf]
      %v755 = vld [vmem:[%s6 + $0x4] sm:$0xf]
      %v756 = vld [vmem:[%s6 + $0x8] sm:$0xf]
      %v757 = vld [vmem:[%s6 + $0xc] sm:$0xf]
      %758 = vmatpush.bf16.msra.mxu0 0
      %759 = vmatpush.bf16.msra.mxu0 0
      %760 = vmatpush.bf16.msra.mxu0 0
      %761 = vmatpush.bf16.msra.mxu0 0
      %762 = vmatpush.bf16.msra.mxu0 0
      %763 = vmatpush.bf16.msra.mxu0 0
      %764 = vmatpush.bf16.msra.mxu0 0
      %765 = vmatpush.bf16.msra.mxu0 %v753
      %766 = vmatmul.bf16.gmra.mxu0 %v700
      %v767 = vpop.f32.mrf.mxu0
      %v768 = vadd.f32 0.0, %v767
      %v769 = vpop.f32.mrf.mxu0
      %v770 = vadd.f32 0.0, %v769
      %771 = vdwg.mxu0
      %v772 = vpack.c.bf16 %v770, %v768
      %v773 = vld [vmem:[%s7] sm:$0x1]
      %v775 = vperm.slane %v773, 0
      %v781 = vunpack.c.l.b16 %v754
      %v782 = vunpack.c.l.b16 %v755
      %v783 = vunpack.c.l.b16 %v756
      %v784 = vunpack.c.l.b16 %v757
      %v785 = vpack.c.b16 %v782, %v781
      %v786 = vpack.c.b16 %v784, %v783
      %v790 = vsel %vm733, %v772, 0
      %792 = vmatpush.bf16.msra.mxu0 0
      %793 = vmatpush.bf16.msra.mxu0 0
      %794 = vmatpush.bf16.msra.mxu0 0
      %795 = vmatpush.bf16.msra.mxu0 0
      %796 = vmatpush.bf16.msra.mxu0 0
      %797 = vmatpush.bf16.msra.mxu0 0
      %798 = vmatpush.bf16.msra.mxu0 %v786
      %799 = vmatpush.bf16.msra.mxu0 %v785
      %800 = vmatmul.bf16.gmra.mxu0 %v790
      %v801 = vpop.f32.mrf.mxu0
      %v802 = vadd.f32 %v775, %v801
      %v803 = vpop.f32.mrf.mxu0
      %v804 = vadd.f32 %v775, %v803
      %805 = vdwg.mxu0
      %v806 = vmax.f32 %v802, 0.0
      %v807 = vmax.f32 %v804, 0.0
      %v808 = vlaneseq
      %v809 = vshrl.u32 %v808, 7
      %v810 = vadd.s32 %v809, 8
      %v811 = vstv %s361
      %vm812 = vcmp.lt.s32.totalorder %v809, %v811
      %vm813 = vcmp.lt.s32.totalorder %v810, %v811
      %v814 = vsel %vm812, 1, 0
      %v815 = vsel %vm813, 1, 0
      %v816 = vcvt.s32.f32 %v814
      %v817 = vcvt.s32.f32 %v815
      %v818 = vmul.f32 %v806, %v816
      %v819 = vmul.f32 %v807, %v817
      %v820 = vsel %vm733, %v818, 0.0
      %v821 = vsel %vm733, %v819, 0.0
      %v822 = vadd.f32 %v820, %v821
      %v823 = vrot.slane %v822, 4
      %v824 = vadd.f32 %v822, %v823
      %v825 = vrot.slane %v824, 2
      %v826 = vadd.f32 %v824, %v825
      %v827 = vrot.slane %v826, 1
      %v828 = vadd.f32 %v826, %v827
      %s829 = scvt.s32.f32 %s361
      %v830 = vstv %s829
      %v831 = vrcp.pop %v830
      %v832 = vmul.f32 %v830, %v831
      %v833 = vsub.f32 1.0, %v832
      %v834 = vmul.f32 %v831, %v833
      %v835 = vadd.f32 %v831, %v834
      %vm836 = vweird.f32 %v830
      %vm837 = vweird.f32 %v831
      %vm838 = vmor %vm836, %vm837
      %v839 = vsel %vm838, %v831, %v835
      %v840 = vand.u32 2147483647, %v830
      %vm841 = vcmp.eq.f32.partialorder %v840, 8.507059e+37
      %v842 = vand.u32 %v830, 2147483648
      %v843 = vor.u32 1.1754944e-38, %v842
      %v844 = vsel %vm841, %v843, %v839
      %v845 = vmul.f32 %v828, %v844
      %v846 = vld [vmem:[%s8] sm:$0x1]
      %v847 = vmul.f32 %v845, %v846
      %vm848 = vcmask 253952
      %v849 = vsel %vm848, %v847, 0.0
      %850 = vadd.xlane.f32.xlu0 %v849
      %v851 = vpop.xlane.xlu0 %850
      %v852 = vld [vmem:[#allocation4] sm:$0x1]
      %v853 = vadd.f32 %v851, %v852
      %vm854 = vcmask 0
      %855 = vst.msk [vmem:[%s359] sm:$0x1] %vm854, %v853
      %p856 = scmp.lt.s32.totalorder %s31, 7
      %s857 = scalar_select %p856, %s31, 7
      %s858 = scalar_lea.vmem %s10, %s857
      // Predicated region
      $region57: #{tpu_custom_call.1} parent=55 // pred_check
        %p859 = pneg %p248
      $region58: #{tpu_custom_call.1} parent=55 // pred_check_branch
        %861 = sbr.rel (%p859) target = $region60
      $region59: #{tpu_custom_call.1} parent=55 // pred_region
        _
      $region60: #{tpu_custom_call.1} parent=55 // pred_fallthru
        _
    $region56: #{tpu_custom_call.1} parent=5 // pred_fallthru
      _
    %p862 = scmp.le.s32.totalorder 2, %s26
    // Predicated region
    $region61: #{tpu_custom_call.1} parent=5 // pred_check
      %p863 = pneg %p862
    $region62: #{tpu_custom_call.1} parent=5 // pred_check_branch
      %865 = sbr.rel (%p863) target = $region64
    $region63: #{tpu_custom_call.1} parent=5 // pred_region
      %s866 = ssub.s32 %s26, 2
      // Predicated region
      $region65: #{tpu_custom_call.1} parent=63 // pred_check
        %p867 = pneg %p254
      $region66: #{tpu_custom_call.1} parent=63 // pred_check_branch
        %869 = sbr.rel (%p867) target = $region68
      $region67: #{tpu_custom_call.1} parent=63 // pred_region
        %p870 = scmp.lt.s32.totalorder %s32, 7
        %s871 = scalar_select %p870, %s32, 7
        %s872 = scalar_lea.vmem %s10, %s871
      $region68: #{tpu_custom_call.1} parent=63 // pred_fallthru
        _
    $region64: #{tpu_custom_call.1} parent=5 // pred_fallthru
      _
  $region6: #{tpu_custom_call.1} parent=0 // loop_footer
    %s30 = sadd.s32 1, %s26
  $region7: #{tpu_custom_call.1} parent=0 // loop_footer_branch
    %25 = sbr.rel target = $region3
  $region8: #{tpu_custom_call.1} parent=0 // loop_exit
    _

</llo_original>
